<compile_context>
chip_gen: v7x
topology: tpu7x:2x2x1
jax: 0.10.0
libtpu: 0.0.40
codegen_flags: <defaults>
</compile_context>

<pallas_src>
import functools

import jax
import jax.numpy as jnp
from jax.experimental import pallas as pl
from jax.experimental.pallas import tpu as pltpu


def _round_up(x, m):
    return ((x + m - 1) // m) * m


def _tpu_vmem_and_cores():
    """Best-effort query of physical VMEM capacity and TensorCore count."""
    vmem_cap = 128 * 1024 * 1024
    num_tc = 0
    try:
        info = pltpu.get_tpu_info()
        vmem_cap = int(getattr(info, "vmem_capacity_bytes", vmem_cap) or vmem_cap)
        num_tc = int(getattr(info, "tensorcores_per_chip",
                             getattr(info, "num_cores", 0)) or 0)
    except Exception:
        pass
    if num_tc <= 0:
        # Heuristic: v7x has 64 MiB VMEM and 2 TCs/chip; v5e/v6e have 128 MiB, 1 TC.
        num_tc = 2 if vmem_cap <= 72 * 1024 * 1024 else 1
    return vmem_cap, num_tc


def _const_spec(shape, index_map):
    """BlockSpec for a grid-invariant operand: single-buffered if supported."""
    try:
        return pl.BlockSpec(shape, index_map, pipeline_mode=pl.Buffered(1))
    except (TypeError, ValueError):
        # Older API without pipeline_mode / Buffered(1): fall back to default.
        return pl.BlockSpec(shape, index_map)


def _make_critic_kernel(n_layers, compute_dtype):
    """Fused-MLP kernel body for a fixed number of hidden layers."""

    def to_compute(x):
        return x if x.dtype == compute_dtype else x.astype(compute_dtype)

    def kernel(*refs):
        if n_layers > 0:
            x_ref, w0_ref, wh_ref, b_ref, head_ref, out_ref = refs
        else:
            x_ref, w0_ref, b_ref, head_ref, out_ref = refs
            wh_ref = None

        # First Linear (no activation after it, per the module definition).
        h = jnp.dot(to_compute(x_ref[...]), w0_ref[...],
                    preferred_element_type=jnp.float32)
        h = h + b_ref[0:1, :]

        # Hidden blocks: Linear -> Dropout -> ReLU (fully unrolled).
        for i in range(n_layers):
            h = jnp.dot(to_compute(h), wh_ref[i],
                        preferred_element_type=jnp.float32)
            h = h + b_ref[i + 1:i + 2, :]
            # TODO(synk): Dropout(p) is applied in eval mode (identity); training
            # parity needs pltpu.prng_seed/prng_random_bits masking + 1/(1-p) scale.
            h = jnp.maximum(h, 0.0)

        # Output head Linear(size, 1): an N=1 MXU matmul would leave the systolic
        # array almost idle, so compute it on VPU (multiply) + XLU (lane reduce)
        # and store it lane-dense as a (1, TILE_B) row (unmasked vst).
        v = jnp.sum(h * head_ref[0:1, :], axis=-1)            # (TILE_B,)
        out_ref[...] = (v[None, :] + head_ref[1:2, 0:1]).astype(out_ref.dtype)

    return kernel


def critic_forward(state, params, n_layers, *, tile_b=None, use_bf16=None):
    """Runs the fused Critic MLP as one pallas_call with a 1-D batch grid.

    state:  (B, state_space) float32
    params: flat list [w0, b0, w1, b1, ..., w_out, b_out]
            weights are (in, out), biases are (1, out)
    """
    B, state_space = state.shape
    size = params[0].shape[1]
    assert len(params) == 2 * (n_layers + 2)

    vmem_cap, num_tc = _tpu_vmem_and_cores()

    if use_bf16 is None:
        # bf16 operands only pay off on real hidden sizes (v6e/v7x MXU); the
        # tiny test config stays f32 for exact parity with the torch module.
        use_bf16 = size >= 256
    compute_dtype = jnp.bfloat16 if use_bf16 else jnp.float32

    # ---- Pack params into few refs: fewer DMA descriptors / VMEM tiles. ----
    w0 = params[0].astype(compute_dtype)                        # (state_space, size)
    b_rows = [params[1].reshape(1, size)]
    wh_list = []
    for i in range(n_layers):
        wh_list.append(params[2 + 2 * i].astype(compute_dtype))
        b_rows.append(params[3 + 2 * i].reshape(1, size))
    b_all = jnp.concatenate(b_rows, axis=0).astype(jnp.float32)   # (n_layers+1, size)
    wo_row = params[-2].reshape(1, size).astype(jnp.float32)
    bo_row = jnp.broadcast_to(params[-1].reshape(1, 1).astype(jnp.float32), (1, size))
    head = jnp.concatenate([wo_row, bo_row], axis=0)              # (2, size)
    wh = jnp.stack(wh_list, axis=0) if n_layers > 0 else None     # (n_layers, size, size)

    weight_arrays = [w0, b_all, head] + ([wh] if wh is not None else [])
    weight_bytes = sum(int(a.size) * a.dtype.itemsize for a in weight_arrays)

    # ---- Batch tile selection: as big as VMEM allows (amortise grid-step
    # overhead); on multi-TC parts split big batches into >= num_tc steps. ----
    b8 = _round_up(B, 8)
    act_row_bytes = 4 * (2 * state_space + 3 * size + 4)          # rough live bytes/row
    vmem_budget = int(0.5 * vmem_cap) - 2 * weight_bytes
    tile_cap = max(8, min(4096, (max(vmem_budget, 0) // max(act_row_bytes, 1)) // 8 * 8))
    if tile_b is None:
        if num_tc > 1 and b8 >= 128 * num_tc:
            tile_b = _round_up(-(-b8 // num_tc), 8)               # >= 2 steps on v7x
        else:
            tile_b = b8                                            # single big tile
    tile_b = max(8, min(_round_up(int(tile_b), 8), b8, tile_cap))

    b_pad = _round_up(B, tile_b)
    if b_pad != B:
        state = jnp.pad(state, ((0, b_pad - B), (0, 0)))
    num_tiles = b_pad // tile_b

    # ---- Block specs. Weights/biases: constant index maps (DMA'd once,
    # VMEM-resident) and single-buffered. ----
    in_specs = [pl.BlockSpec((tile_b, state_space), lambda i: (i, 0))]
    in_specs.append(_const_spec(w0.shape, lambda i: (0, 0)))
    if wh is not None:
        in_specs.append(_const_spec(wh.shape, lambda i: (0, 0, 0)))
    in_specs.append(_const_spec(b_all.shape, lambda i: (0, 0)))
    in_specs.append(_const_spec(head.shape, lambda i: (0, 0)))
    # Lane-dense output: one (1, tile_b) row per grid step.
    out_specs = pl.BlockSpec((1, tile_b), lambda i: (i, 0))

    # ---- VMEM budget: resident weights + double-buffered I/O tiles + live
    # activations, capped at ~80% of the chip's physical VMEM. ----
    io_bytes = 2 * tile_b * (state_space + 1) * 4
    act_bytes = 3 * tile_b * size * 4
    need = 2 * weight_bytes + io_bytes + act_bytes + (2 << 20)
    vmem_limit = int(min(int(0.8 * vmem_cap), max(8 << 20, 2 * need)))

    flops = 2 * b_pad * (state_space * size + n_layers * size * size + size)
    bytes_accessed = b_pad * state_space * 4 + weight_bytes + b_pad * 4

    kernel = _make_critic_kernel(n_layers, compute_dtype)
    inputs = [state, w0] + ([wh] if wh is not None else []) + [b_all, head]

    out = pl.pallas_call(
        kernel,
        out_shape=jax.ShapeDtypeStruct((num_tiles, tile_b), jnp.float32),
        grid=(num_tiles,),
        in_specs=in_specs,
        out_specs=out_specs,
        compiler_params=pltpu.CompilerParams(
            dimension_semantics=("parallel",),
            vmem_limit_bytes=vmem_limit),
        cost_estimate=pl.CostEstimate(
            flops=flops, transcendentals=0, bytes_accessed=bytes_accessed),
    )(*inputs)

    return out.reshape(b_pad, 1)[:B]


def init_critic_params(key, state_space, size, n_layers):
    """Deterministic PyTorch-Linear-style init (uniform +/- 1/sqrt(fan_in)).

    Returns weights already transposed to (in_features, out_features)."""
    dims = [(state_space, size)]
    dims += [(size, size) for _ in range(n_layers)]
    dims += [(size, 1)]

    params = []
    for (fan_in, fan_out) in dims:
        key, kw, kb = jax.random.split(key, 3)
        bound = 1.0 / jnp.sqrt(jnp.float32(fan_in))
        w = jax.random.uniform(kw, (fan_in, fan_out), jnp.float32, -bound, bound)
        b = jax.random.uniform(kb, (1, fan_out), jnp.float32, -bound, bound)
        params += [w, b]
    return params


def critic_forward_ref(state, params, n_layers):
    """Pure-JAX reference for correctness checking."""
    h = state @ params[0] + params[1]
    for i in range(n_layers):
        h = jnp.maximum(h @ params[2 + 2 * i] + params[3 + 2 * i], 0.0)
    return h @ params[-2] + params[-1]


if __name__ == "__main__":
    # Shapes consistent with Critic(gamma, lr, 'linear', state_space=4,
    # size=32, n_layers=2).
    STATE_SPACE, SIZE, N_LAYERS = 4, 32, 2

    key = jax.random.PRNGKey(0)
    key, k1, k2, k3 = jax.random.split(key, 4)
    params = init_critic_params(key, STATE_SPACE, SIZE, N_LAYERS)

    # Case 1: tiny batch (single grid step, tile = padded batch).
    B1 = 8
    state1 = jax.random.normal(k1, (B1, STATE_SPACE), dtype=jnp.float32)
    fwd_auto = jax.jit(functools.partial(critic_forward, n_layers=N_LAYERS))
    v1 = jax.block_until_ready(fwd_auto(state1, params))
    ref1 = critic_forward_ref(state1, params, N_LAYERS)
    assert v1.shape == (B1, 1)
    assert jnp.allclose(v1, ref1, atol=1e-5, rtol=1e-4), (
        "Pallas output does not match reference (small batch)")

    # Case 2: explicit 128-row tiles -> B=200 pads to 256, 2 grid steps,
    # exercises padding + lane-dense (1, 128) output rows.
    B2 = 200
    state2 = jax.random.normal(k2, (B2, STATE_SPACE), dtype=jnp.float32)
    fwd_grid = jax.jit(
        functools.partial(critic_forward, n_layers=N_LAYERS, tile_b=128))
    v2 = jax.block_until_ready(fwd_grid(state2, params))
    ref2 = critic_forward_ref(state2, params, N_LAYERS)
    assert v2.shape == (B2, 1)
    assert jnp.allclose(v2, ref2, atol=1e-5, rtol=1e-4), (
        "Pallas output does not match reference (gridded batch)")

    # Case 3: larger batch with auto tiling (one big tile on v5e/v6e,
    # two tiles / both TensorCores on v7x).
    B3 = 1024
    state3 = jax.random.normal(k3, (B3, STATE_SPACE), dtype=jnp.float32)
    v3 = jax.block_until_ready(fwd_auto(state3, params))
    ref3 = critic_forward_ref(state3, params, N_LAYERS)
    assert v3.shape == (B3, 1)
    assert jnp.allclose(v3, ref3, atol=1e-5, rtol=1e-4), (
        "Pallas output does not match reference (large auto-tiled batch)")

    print("KERNEL_OK")
</pallas_src>

<mosaic_0001>
module attributes {stable_mosaic.version = 11 : i64} {
  func.func @kernel(%arg0: i32, %arg1: memref<8x4xf32, #tpu.memory_space<vmem>>, %arg2: memref<4x32xf32, #tpu.memory_space<vmem>>, %arg3: memref<2x32x32xf32, #tpu.memory_space<vmem>>, %arg4: memref<3x32xf32, #tpu.memory_space<vmem>>, %arg5: memref<2x32xf32, #tpu.memory_space<vmem>>, %arg6: memref<1x8xf32, #tpu.memory_space<vmem>>) attributes {dimension_semantics = [#tpu.dimension_semantics<parallel>], iteration_bounds = array<i64: 1>, scalar_prefetch = 0 : i64, scratch_operands = 0 : i64, tpu.core_type = #tpu.core_type<tc>, window_params = [{transform_indices = @transform_0, window_bounds = array<i64: 8, 4>}, {pipeline_mode = #tpu.pipeline_mode<synchronous>, transform_indices = @transform_1, window_bounds = array<i64: 4, 32>}, {pipeline_mode = #tpu.pipeline_mode<synchronous>, transform_indices = @transform_2, window_bounds = array<i64: 2, 32, 32>}, {pipeline_mode = #tpu.pipeline_mode<synchronous>, transform_indices = @transform_3, window_bounds = array<i64: 3, 32>}, {pipeline_mode = #tpu.pipeline_mode<synchronous>, transform_indices = @transform_4, window_bounds = array<i64: 2, 32>}, {transform_indices = @transform_5, window_bounds = array<i64: 1, 8>}]} {
    %c0 = arith.constant 0 : index
    %c0_0 = arith.constant 0 : index
    %0 = vector.load %arg1[%c0, %c0_0] : memref<8x4xf32, #tpu.memory_space<vmem>>, vector<8x4xf32>
    %c0_1 = arith.constant 0 : index
    %c0_2 = arith.constant 0 : index
    %1 = vector.load %arg2[%c0_1, %c0_2] : memref<4x32xf32, #tpu.memory_space<vmem>>, vector<4x32xf32>
    %cst = arith.constant dense<0.000000e+00> : vector<8x32xf32>
    %2 = tpu.matmul %0, %1, %cst {dimension_numbers = #tpu.dot_dimension_numbers<[1], [0], [0], [1], [0, 0, 1, 1], [], []>} : vector<8x4xf32>, vector<4x32xf32>, vector<8x32xf32> -> vector<8x32xf32>
    %c0_3 = arith.constant 0 : index
    %c0_4 = arith.constant 0 : index
    %3 = vector.load %arg4[%c0_3, %c0_4] : memref<3x32xf32, #tpu.memory_space<vmem>>, vector<1x32xf32>
    %4 = vector.broadcast %3 : vector<1x32xf32> to vector<8x32xf32>
    %5 = arith.addf %2, %4 : vector<8x32xf32>
    %c0_5 = arith.constant 0 : index
    %c0_6 = arith.constant 0 : index
    %c0_7 = arith.constant 0 : index
    %6 = vector.load %arg3[%c0_5, %c0_6, %c0_7] : memref<2x32x32xf32, #tpu.memory_space<vmem>>, vector<1x32x32xf32>
    %7 = vector.shape_cast %6 : vector<1x32x32xf32> to vector<32x32xf32>
    %cst_8 = arith.constant dense<0.000000e+00> : vector<8x32xf32>
    %8 = tpu.matmul %5, %7, %cst_8 {dimension_numbers = #tpu.dot_dimension_numbers<[1], [0], [0], [1], [0, 0, 1, 1], [], []>} : vector<8x32xf32>, vector<32x32xf32>, vector<8x32xf32> -> vector<8x32xf32>
    %c1 = arith.constant 1 : index
    %c0_9 = arith.constant 0 : index
    %9 = vector.load %arg4[%c1, %c0_9] : memref<3x32xf32, #tpu.memory_space<vmem>>, vector<1x32xf32>
    %10 = vector.broadcast %9 : vector<1x32xf32> to vector<8x32xf32>
    %11 = arith.addf %8, %10 : vector<8x32xf32>
    %cst_10 = arith.constant 0.000000e+00 : f32
    %12 = vector.broadcast %cst_10 : f32 to vector<8x32xf32>
    %13 = arith.maximumf %11, %12 : vector<8x32xf32>
    %c1_11 = arith.constant 1 : index
    %c0_12 = arith.constant 0 : index
    %c0_13 = arith.constant 0 : index
    %14 = vector.load %arg3[%c1_11, %c0_12, %c0_13] : memref<2x32x32xf32, #tpu.memory_space<vmem>>, vector<1x32x32xf32>
    %15 = vector.shape_cast %14 : vector<1x32x32xf32> to vector<32x32xf32>
    %cst_14 = arith.constant dense<0.000000e+00> : vector<8x32xf32>
    %16 = tpu.matmul %13, %15, %cst_14 {dimension_numbers = #tpu.dot_dimension_numbers<[1], [0], [0], [1], [0, 0, 1, 1], [], []>} : vector<8x32xf32>, vector<32x32xf32>, vector<8x32xf32> -> vector<8x32xf32>
    %c2 = arith.constant 2 : index
    %c0_15 = arith.constant 0 : index
    %17 = vector.load %arg4[%c2, %c0_15] : memref<3x32xf32, #tpu.memory_space<vmem>>, vector<1x32xf32>
    %18 = vector.broadcast %17 : vector<1x32xf32> to vector<8x32xf32>
    %19 = arith.addf %16, %18 : vector<8x32xf32>
    %cst_16 = arith.constant 0.000000e+00 : f32
    %20 = vector.broadcast %cst_16 : f32 to vector<8x32xf32>
    %21 = arith.maximumf %19, %20 : vector<8x32xf32>
    %c0_17 = arith.constant 0 : index
    %c0_18 = arith.constant 0 : index
    %22 = vector.load %arg5[%c0_17, %c0_18] : memref<2x32xf32, #tpu.memory_space<vmem>>, vector<1x32xf32>
    %23 = vector.broadcast %22 : vector<1x32xf32> to vector<8x32xf32>
    %24 = arith.mulf %21, %23 : vector<8x32xf32>
    %cst_19 = arith.constant dense<0.000000e+00> : vector<8xf32>
    %25 = vector.multi_reduction <add>, %24, %cst_19 [1] : vector<8x32xf32> to vector<8xf32>
    %26 = vector.shape_cast %25 : vector<8xf32> to vector<1x8xf32>
    %c1_20 = arith.constant 1 : index
    %c0_21 = arith.constant 0 : index
    %27 = vector.load %arg5[%c1_20, %c0_21] : memref<2x32xf32, #tpu.memory_space<vmem>>, vector<1x1xf32>
    %28 = vector.broadcast %27 : vector<1x1xf32> to vector<1x8xf32>
    %29 = arith.addf %26, %28 : vector<1x8xf32>
    %c0_22 = arith.constant 0 : index
    %c0_23 = arith.constant 0 : index
    %30 = vector.load %arg6[%c0_22, %c0_23] : memref<1x8xf32, #tpu.memory_space<vmem>>, vector<1x8xf32>
    tpu.vector_store %arg6[%c0_22, %c0_23], %29 {strides = array<i32>} : memref<1x8xf32, #tpu.memory_space<vmem>>, vector<1x8xf32>,
    return
  }
  func.func @transform_0(%arg0: i32) -> (i32, i32) {
    %c0_i32 = arith.constant 0 : i32
    %c0_i32_0 = arith.constant 0 : i32
    return %arg0, %c0_i32 : i32, i32
  }
  func.func @transform_1(%arg0: i32) -> (i32, i32) {
    %c0_i32 = arith.constant 0 : i32
    %c0_i32_0 = arith.constant 0 : i32
    %c0_i32_1 = arith.constant 0 : i32
    return %c0_i32, %c0_i32_0 : i32, i32
  }
  func.func @transform_2(%arg0: i32) -> (i32, i32, i32) {
    %c0_i32 = arith.constant 0 : i32
    %c0_i32_0 = arith.constant 0 : i32
    %c0_i32_1 = arith.constant 0 : i32
    %c0_i32_2 = arith.constant 0 : i32
    return %c0_i32, %c0_i32_0, %c0_i32_1 : i32, i32, i32
  }
  func.func @transform_3(%arg0: i32) -> (i32, i32) {
    %c0_i32 = arith.constant 0 : i32
    %c0_i32_0 = arith.constant 0 : i32
    %c0_i32_1 = arith.constant 0 : i32
    return %c0_i32, %c0_i32_0 : i32, i32
  }
  func.func @transform_4(%arg0: i32) -> (i32, i32) {
    %c0_i32 = arith.constant 0 : i32
    %c0_i32_0 = arith.constant 0 : i32
    %c0_i32_1 = arith.constant 0 : i32
    return %c0_i32, %c0_i32_0 : i32, i32
  }
  func.func @transform_5(%arg0: i32) -> (i32, i32) {
    %c0_i32 = arith.constant 0 : i32
    %c0_i32_0 = arith.constant 0 : i32
    return %arg0, %c0_i32 : i32, i32
  }
}

</mosaic_0001>

<llo_original>
// kernel: critic_forward.1
$region0: #{critic_forward.1}
  #allocation0 [shape = 'u32[]', space=smem, size = 0x4, offset = 0x4, fixed_abs, tag = 'smem constant byte address 0x4 - core index']
  #allocation1 [shape = 'u32[144,128]{1,0:T(1,128)}', space=vmem, size = 0x12000, scoped, tag = 'internal scratch']
  %s0 = inlined_call_operand.vmem [shape: f32[8,4], index: 0, kind: input, shape index: {}]
  %s1 = inlined_call_operand.vmem [shape: f32[4,32], index: 1, kind: input, shape index: {}]
  %s2 = inlined_call_operand.vmem [shape: f32[2,32,32], index: 2, kind: input, shape index: {}]
  %s3 = inlined_call_operand.vmem [shape: f32[3,32], index: 3, kind: input, shape index: {}]
  %s4 = inlined_call_operand.vmem [shape: f32[2,32], index: 4, kind: input, shape index: {}]
  %s5 = inlined_call_operand.hbm [shape: f32[1,8], index: 5, kind: output, shape index: {}]
  %s6 = sld [smem:[#allocation0]]
  $region30: #{critic_forward.1} parent=0
    _
  %s8 = ssub.s32 1, %s6
  %s9 = scalar_select 0, %s8, %s6
  $region1: #{critic_forward.1} parent=0
    #allocation2 [shape = 'u8[512]{0}', space=vmem, size = 0x400, scoped, tag = 'output window, operand 0, single buffered']
    #allocation3 [shape = 's32[1]{0}', space=sflag, size = 0x4, scoped, tag = 'scoped memory for critic_forward.1']
    %10 = vsyncpa [#allocation3], 0
    // Predicated region
    $region2: #{critic_forward.1} parent=1 // pred_check
      _
    $region3: #{critic_forward.1} parent=1 // pred_check_branch
      %12 = sbr.rel (0) target = $region5
    $region4: #{critic_forward.1} parent=1 // pred_region
      _
    $region5: #{critic_forward.1} parent=1 // pred_fallthru
      _
    // Predicated region
    $region6: #{critic_forward.1} parent=1 // pred_check
      _
    $region7: #{critic_forward.1} parent=1 // pred_check_branch
      %14 = sbr.rel (0) target = $region9
    $region8: #{critic_forward.1} parent=1 // pred_region
      _
    $region9: #{critic_forward.1} parent=1 // pred_fallthru
      _
    // Predicated region
    $region10: #{critic_forward.1} parent=1 // pred_check
      _
    $region11: #{critic_forward.1} parent=1 // pred_check_branch
      %16 = sbr.rel (0) target = $region13
    $region12: #{critic_forward.1} parent=1 // pred_region
      _
    $region13: #{critic_forward.1} parent=1 // pred_fallthru
      _
    // Predicated region
    $region14: #{critic_forward.1} parent=1 // pred_check
      _
    $region15: #{critic_forward.1} parent=1 // pred_check_branch
      %18 = sbr.rel (0) target = $region17
    $region16: #{critic_forward.1} parent=1 // pred_region
      _
    $region17: #{critic_forward.1} parent=1 // pred_fallthru
      _
    // Predicated region
    $region18: #{critic_forward.1} parent=1 // pred_check
      _
    $region19: #{critic_forward.1} parent=1 // pred_check_branch
      %20 = sbr.rel (0) target = $region21
    $region20: #{critic_forward.1} parent=1 // pred_region
      _
    $region21: #{critic_forward.1} parent=1 // pred_fallthru
      _
    %v21 = vld [vmem:[%s0] sm:$0xff]
    %v22 = vld [vmem:[%s1] sm:$0xf]
    %v23 = vld [vmem:[%s3] sm:$0x1]
    %v24 = vlaneseq
    %v25 = vshrl.u32 %v24, 7
    %v26 = vsub.s32 0, %v25
    %v27 = vrot.slane %v23, %v26
    %vm28 = vcmask 31744
    %v30 = vsel %vm28, %v21, 0
    %vm32 = vcmask 1043456
    %v34 = vsel %vm32, %v22, 0
    %36 = vmatprep.subr.mxu0 0.0
    %37 = vmatpush1.msra.mxu0 %v34
    %38 = vmatprep.subr.mxu0 0.0
    %39 = vmatpush1.msra.mxu0 0.0
    %40 = vmatprep.subr.mxu0 0.0
    %41 = vmatpush1.msra.mxu0 0.0
    %42 = vmatprep.subr.mxu0 0.0
    %43 = vmatpush1.msra.mxu0 0.0
    %44 = vmatprep.subr.mxu0 0.0
    %45 = vmatpush1.msra.mxu0 0.0
    %46 = vmatprep.subr.mxu0 0.0
    %47 = vmatpush1.msra.mxu0 0.0
    %48 = vmatprep.subr.mxu0 0.0
    %49 = vmatpush1.msra.mxu0 0.0
    %50 = vmatprep.subr.mxu0 0.0
    %51 = vmatpush1.msra.mxu0 0.0
    %52 = vmatprep.subr.mxu0 0.0
    %53 = vmatpush1.msra.mxu0 0.0
    %54 = vmatprep.subr.mxu0 0.0
    %55 = vmatpush1.msra.mxu0 0.0
    %56 = vmatprep.subr.mxu0 0.0
    %57 = vmatpush1.msra.mxu0 0.0
    %58 = vmatprep.subr.mxu0 0.0
    %59 = vmatpush1.msra.mxu0 0.0
    %60 = vmatprep.subr.mxu0 0.0
    %61 = vmatpush1.msra.mxu0 0.0
    %62 = vmatprep.subr.mxu0 0.0
    %63 = vmatpush1.msra.mxu0 0.0
    %64 = vmatprep.subr.mxu0 0.0
    %65 = vmatpush1.msra.mxu0 0.0
    %66 = vmatprep.subr.mxu0 0.0
    %67 = vmatpush1.msra.mxu0 0.0
    %68 = vmatprep.subr.mxu0 0.0
    %69 = vmatpush1.msra.mxu0 0.0
    %70 = vmatprep.subr.mxu0 0.0
    %71 = vmatpush1.msra.mxu0 0.0
    %72 = vmatprep.subr.mxu0 0.0
    %73 = vmatpush1.msra.mxu0 0.0
    %74 = vmatprep.subr.mxu0 0.0
    %75 = vmatpush1.msra.mxu0 0.0
    %76 = vmatprep.subr.mxu0 0.0
    %77 = vmatpush1.msra.mxu0 0.0
    %78 = vmatprep.subr.mxu0 0.0
    %79 = vmatpush1.msra.mxu0 0.0
    %80 = vmatprep.subr.mxu0 0.0
    %81 = vmatpush1.msra.mxu0 0.0
    %82 = vmatprep.subr.mxu0 0.0
    %83 = vmatpush1.msra.mxu0 0.0
    %84 = vmatprep.subr.mxu0 0.0
    %85 = vmatpush1.msra.mxu0 0.0
    %86 = vmatprep.subr.mxu0 0.0
    %87 = vmatpush1.msra.mxu0 0.0
    %88 = vmatprep.subr.mxu0 0.0
    %89 = vmatpush1.msra.mxu0 0.0
    %90 = vmatprep.subr.mxu0 0.0
    %91 = vmatpush1.msra.mxu0 0.0
    %92 = vmatprep.subr.mxu0 0.0
    %93 = vmatpush1.msra.mxu0 0.0
    %94 = vmatprep.subr.mxu0 0.0
    %95 = vmatpush1.msra.mxu0 0.0
    %96 = vmatprep.subr.mxu0 0.0
    %97 = vmatpush1.msra.mxu0 0.0
    %98 = vmatprep.subr.mxu0 0.0
    %99 = vmatpush1.msra.mxu0 0.0
    %100 = vmatprep.mubr.f32.mxu0 0.0
    %101 = vmatmul.mubr.f32.gmra.mrb[0].mxu0 %v30
    %v102 = vpop.f32.mrb[0].mxu0
    %v103 = vadd.f32 %v27, %v102
    %v104 = vpop.f32.mrb[0].mxu0
    %105 = vdwg.mxu0
    %v106 = vld [vmem:[%s2] sm:$0xff]
    %v107 = vld [vmem:[%s2 + $0x8] sm:$0xff]
    %v108 = vld [vmem:[%s2 + $0x10] sm:$0xff]
    %v109 = vld [vmem:[%s2 + $0x18] sm:$0xff]
    %v110 = vld [vmem:[%s3 + $0x1] sm:$0x1]
    %v111 = vlaneseq
    %v112 = vshrl.u32 %v111, 7
    %v113 = vsub.s32 0, %v112
    %v114 = vrot.slane %v110, %v113
    %vm115 = vcmask 261120
    %v117 = vsel %vm115, %v103, 0
    %119 = vmatprep.subr.mxu0 0.0
    %120 = vmatpush1.msra.mxu0 %v106
    %121 = vmatprep.subr.mxu0 0.0
    %122 = vmatpush1.msra.mxu0 %v107
    %123 = vmatprep.subr.mxu0 0.0
    %124 = vmatpush1.msra.mxu0 %v108
    %125 = vmatprep.subr.mxu0 0.0
    %126 = vmatpush1.msra.mxu0 %v109
    %127 = vmatprep.subr.mxu0 0.0
    %128 = vmatpush1.msra.mxu0 0.0
    %129 = vmatprep.subr.mxu0 0.0
    %130 = vmatpush1.msra.mxu0 0.0
    %131 = vmatprep.subr.mxu0 0.0
    %132 = vmatpush1.msra.mxu0 0.0
    %133 = vmatprep.subr.mxu0 0.0
    %134 = vmatpush1.msra.mxu0 0.0
    %135 = vmatprep.subr.mxu0 0.0
    %136 = vmatpush1.msra.mxu0 0.0
    %137 = vmatprep.subr.mxu0 0.0
    %138 = vmatpush1.msra.mxu0 0.0
    %139 = vmatprep.subr.mxu0 0.0
    %140 = vmatpush1.msra.mxu0 0.0
    %141 = vmatprep.subr.mxu0 0.0
    %142 = vmatpush1.msra.mxu0 0.0
    %143 = vmatprep.subr.mxu0 0.0
    %144 = vmatpush1.msra.mxu0 0.0
    %145 = vmatprep.subr.mxu0 0.0
    %146 = vmatpush1.msra.mxu0 0.0
    %147 = vmatprep.subr.mxu0 0.0
    %148 = vmatpush1.msra.mxu0 0.0
    %149 = vmatprep.subr.mxu0 0.0
    %150 = vmatpush1.msra.mxu0 0.0
    %151 = vmatprep.subr.mxu0 0.0
    %152 = vmatpush1.msra.mxu0 0.0
    %153 = vmatprep.subr.mxu0 0.0
    %154 = vmatpush1.msra.mxu0 0.0
    %155 = vmatprep.subr.mxu0 0.0
    %156 = vmatpush1.msra.mxu0 0.0
    %157 = vmatprep.subr.mxu0 0.0
    %158 = vmatpush1.msra.mxu0 0.0
    %159 = vmatprep.subr.mxu0 0.0
    %160 = vmatpush1.msra.mxu0 0.0
    %161 = vmatprep.subr.mxu0 0.0
    %162 = vmatpush1.msra.mxu0 0.0
    %163 = vmatprep.subr.mxu0 0.0
    %164 = vmatpush1.msra.mxu0 0.0
    %165 = vmatprep.subr.mxu0 0.0
    %166 = vmatpush1.msra.mxu0 0.0
    %167 = vmatprep.subr.mxu0 0.0
    %168 = vmatpush1.msra.mxu0 0.0
    %169 = vmatprep.subr.mxu0 0.0
    %170 = vmatpush1.msra.mxu0 0.0
    %171 = vmatprep.subr.mxu0 0.0
    %172 = vmatpush1.msra.mxu0 0.0
    %173 = vmatprep.subr.mxu0 0.0
    %174 = vmatpush1.msra.mxu0 0.0
    %175 = vmatprep.subr.mxu0 0.0
    %176 = vmatpush1.msra.mxu0 0.0
    %177 = vmatprep.subr.mxu0 0.0
    %178 = vmatpush1.msra.mxu0 0.0
    %179 = vmatprep.subr.mxu0 0.0
    %180 = vmatpush1.msra.mxu0 0.0
    %181 = vmatprep.subr.mxu0 0.0
    %182 = vmatpush1.msra.mxu0 0.0
    %183 = vmatprep.mubr.f32.mxu0 0.0
    %184 = vmatmul.mubr.f32.gmra.mrb[0].mxu0 %v117
    %v185 = vpop.f32.mrb[0].mxu0
    %v186 = vadd.f32 %v114, %v185
    %v187 = vpop.f32.mrb[0].mxu0
    %188 = vdwg.mxu0
    %v189 = vmax.f32 %v186, 0.0
    %s190 = scalar_lea.vmem %s2, 32
    %v191 = vld [vmem:[%s190] sm:$0xff]
    %v192 = vld [vmem:[%s190 + $0x8] sm:$0xff]
    %v193 = vld [vmem:[%s190 + $0x10] sm:$0xff]
    %v194 = vld [vmem:[%s190 + $0x18] sm:$0xff]
    %v195 = vld [vmem:[%s3 + $0x2] sm:$0x1]
    %v196 = vlaneseq
    %v197 = vshrl.u32 %v196, 7
    %v198 = vsub.s32 0, %v197
    %v199 = vrot.slane %v195, %v198
    %v201 = vsel %vm115, %v189, 0
    %203 = vmatprep.subr.mxu0 0.0
    %204 = vmatpush1.msra.mxu0 %v191
    %205 = vmatprep.subr.mxu0 0.0
    %206 = vmatpush1.msra.mxu0 %v192
    %207 = vmatprep.subr.mxu0 0.0
    %208 = vmatpush1.msra.mxu0 %v193
    %209 = vmatprep.subr.mxu0 0.0
    %210 = vmatpush1.msra.mxu0 %v194
    %211 = vmatprep.subr.mxu0 0.0
    %212 = vmatpush1.msra.mxu0 0.0
    %213 = vmatprep.subr.mxu0 0.0
    %214 = vmatpush1.msra.mxu0 0.0
    %215 = vmatprep.subr.mxu0 0.0
    %216 = vmatpush1.msra.mxu0 0.0
    %217 = vmatprep.subr.mxu0 0.0
    %218 = vmatpush1.msra.mxu0 0.0
    %219 = vmatprep.subr.mxu0 0.0
    %220 = vmatpush1.msra.mxu0 0.0
    %221 = vmatprep.subr.mxu0 0.0
    %222 = vmatpush1.msra.mxu0 0.0
    %223 = vmatprep.subr.mxu0 0.0
    %224 = vmatpush1.msra.mxu0 0.0
    %225 = vmatprep.subr.mxu0 0.0
    %226 = vmatpush1.msra.mxu0 0.0
    %227 = vmatprep.subr.mxu0 0.0
    %228 = vmatpush1.msra.mxu0 0.0
    %229 = vmatprep.subr.mxu0 0.0
    %230 = vmatpush1.msra.mxu0 0.0
    %231 = vmatprep.subr.mxu0 0.0
    %232 = vmatpush1.msra.mxu0 0.0
    %233 = vmatprep.subr.mxu0 0.0
    %234 = vmatpush1.msra.mxu0 0.0
    %235 = vmatprep.subr.mxu0 0.0
    %236 = vmatpush1.msra.mxu0 0.0
    %237 = vmatprep.subr.mxu0 0.0
    %238 = vmatpush1.msra.mxu0 0.0
    %239 = vmatprep.subr.mxu0 0.0
    %240 = vmatpush1.msra.mxu0 0.0
    %241 = vmatprep.subr.mxu0 0.0
    %242 = vmatpush1.msra.mxu0 0.0
    %243 = vmatprep.subr.mxu0 0.0
    %244 = vmatpush1.msra.mxu0 0.0
    %245 = vmatprep.subr.mxu0 0.0
    %246 = vmatpush1.msra.mxu0 0.0
    %247 = vmatprep.subr.mxu0 0.0
    %248 = vmatpush1.msra.mxu0 0.0
    %249 = vmatprep.subr.mxu0 0.0
    %250 = vmatpush1.msra.mxu0 0.0
    %251 = vmatprep.subr.mxu0 0.0
    %252 = vmatpush1.msra.mxu0 0.0
    %253 = vmatprep.subr.mxu0 0.0
    %254 = vmatpush1.msra.mxu0 0.0
    %255 = vmatprep.subr.mxu0 0.0
    %256 = vmatpush1.msra.mxu0 0.0
    %257 = vmatprep.subr.mxu0 0.0
    %258 = vmatpush1.msra.mxu0 0.0
    %259 = vmatprep.subr.mxu0 0.0
    %260 = vmatpush1.msra.mxu0 0.0
    %261 = vmatprep.subr.mxu0 0.0
    %262 = vmatpush1.msra.mxu0 0.0
    %263 = vmatprep.subr.mxu0 0.0
    %264 = vmatpush1.msra.mxu0 0.0
    %265 = vmatprep.subr.mxu0 0.0
    %266 = vmatpush1.msra.mxu0 0.0
    %267 = vmatprep.mubr.f32.mxu0 0.0
    %268 = vmatmul.mubr.f32.gmra.mrb[0].mxu0 %v201
    %v269 = vpop.f32.mrb[0].mxu0
    %v270 = vadd.f32 %v199, %v269
    %v271 = vpop.f32.mrb[0].mxu0
    %272 = vdwg.mxu0
    %v273 = vmax.f32 %v270, 0.0
    %v274 = vld [vmem:[%s4] sm:$0x1]
    %v275 = vlaneseq
    %v276 = vshrl.u32 %v275, 7
    %v277 = vsub.s32 0, %v276
    %v278 = vrot.slane %v274, %v277
    %v279 = vmul.f32 %v273, %v278
    %v280 = vsel %vm115, %v279, 0.0
    %281 = vadd.xlane.f32.xlu0 %v280
    %v282 = vpop.xlane.xlu0 %281
    %v283 = vld [vmem:[%s4 + $0x1] sm:$0x1]
    %285 = vset.pattern.permute.xlu0 0
    %286 = vperm.xlu0 %285, %v283
    %v287 = vpop.permute.xlu0 %286
    %v288 = vlaneseq
    %v289 = vshrl.u32 %v288, 7
    %v290 = vsub.s32 0, %v289
    %v291 = vrot.slane %v287, %v290
    %v293 = vadd.f32 %v282, %v291
    %295 = vset.pattern.permute.xlu0 0
    %296 = vperm.xlu0 %295, %v293
    %v297 = vpop.permute.xlu0 %296
    %v298 = vlaneseq
    %v299 = vand.u32 %v298, 127
    %v300 = vlaneseq
    %v301 = vshrl.u32 %v300, 7
    %v302 = vsub.s32 %v299, %v301
    %v303 = vrot.slane %v297, %v302
    %vm305 = vcmask 57344
    %306 = vst.msk [vmem:[#allocation2] sm:$0x1] %vm305, %v303
    // Predicated region
    $region22: #{critic_forward.1} parent=1 // pred_check
      _
    $region23: #{critic_forward.1} parent=1 // pred_check_branch
      %308 = sbr.rel (0) target = $region25
    $region24: #{critic_forward.1} parent=1 // pred_region
      %s310 = ssub.s32 16, 16
      %311 = vsyncadd [#allocation3], %s310
      %s313 = sshll.u32 [#allocation2], 4
      %s314 = int_to_ptr.vmem [resolvable:$true] %s313
      %316 = dma.vmem_to_hbm [thread:$0]  %s314, 16, %s5, [#allocation3]
    $region25: #{critic_forward.1} parent=1 // pred_fallthru
      _
    // Predicated region
    $region26: #{critic_forward.1} parent=1 // pred_check
      _
    $region27: #{critic_forward.1} parent=1 // pred_check_branch
      %318 = sbr.rel (0) target = $region29
    $region28: #{critic_forward.1} parent=1 // pred_region
      %319 = dma.done [#allocation3], 16
    $region29: #{critic_forward.1} parent=1 // pred_fallthru
      _
    %320 = vsyncpa [#allocation3], 1

</llo_original>
